<compile_context>
chip_gen: v6e
topology: v6e:2x2x1
jax: 0.10.0
libtpu: 0.0.40
codegen_flags: <defaults>
</compile_context>

<pallas_src>
import jax
import jax.numpy as jnp
import numpy as np
from jax.experimental import pallas as pl
from jax.experimental.pallas import tpu as pltpu

# ---- model args (small, consistent with the module) ----
S = 8          # seqlen_sum
DIM = 32       # args.dim
H = 4          # args.n_heads
KV = 2         # args.n_kv_heads
HD = 8         # args.head_dim  (n_heads * head_dim == dim)
HIDDEN = 64    # args.hidden_dim
EPS = 1e-6     # args.norm_eps
ROPE_THETA = 10000.0
NEG_INF = -1e30   # finite: f32 scores path => no NaN even if a row were fully masked

QW = H * HD        # 32  fused-projection Q width
KW = KV * HD       # 16  fused-projection K / V width
REP = H // KV      # 2   query heads per kv head
TBL_W = 2 * (QW + KW) + S   # 104: [cos(48) | sin(48) | causal bias(S)]


def transformer_block_kernel(x_ref, wqkv_ref, wo_ref, w13_ref, w2_ref,
                             norms_ref, tbl_ref, o_ref):
    x = x_ref[...]                                               # (S, DIM) f32

    # --- attention_norm (RMSNorm, f32 like the module's x.float() path) ---
    an = norms_ref[0:1, :]                                       # (1, DIM)
    var = jnp.mean(x * x, axis=-1, keepdims=True)
    h_bf = (x * jax.lax.rsqrt(var + EPS) * an).astype(jnp.bfloat16)

    # --- single fused projection: [Q_rot | K_rot | V | Q_swap | K_swap] columns ---
    # bf16 in, f32 accumulate on the MXU.  Softmax scale pre-baked into the Q columns.
    qkv = jnp.dot(h_bf, wqkv_ref[...], preferred_element_type=jnp.float32)  # (S, 112)

    # --- RoPE: half-rotated basis; the half-swap is baked into the extra weight columns,
    # so rotation is one elementwise FMA against the cos/sin table (no lane shuffles). ---
    cos_all = tbl_ref[0:S, 0:QW + KW]                            # (S, 48)
    sin_all = tbl_ref[0:S, QW + KW:2 * (QW + KW)]                # (S, 48), sign-baked
    qk_rot = qkv[:, 0:QW + KW] * cos_all + qkv[:, QW + 2 * KW:] * sin_all
    xq = qk_rot[:, 0:QW]                                         # (S, H*HD)
    xk = qk_rot[:, QW:QW + KW]                                   # (S, KV*HD)
    xv = qkv[:, QW + KW:QW + 2 * KW]                             # (S, KV*HD)

    # causal bias (single packed sequence), pre-tiled for the REP sublane-stacked heads
    bias2 = tbl_ref[:, 2 * (QW + KW):2 * (QW + KW) + S]          # (REP*S, S)

    # --- attention, batched per kv head: stack the REP query heads sharing this kv head
    # along sublanes so scores / P@V are one (REP*S, HD)x(HD, .) matmul each. ---
    dn = (((1,), (1,)), ((), ()))    # contract last dims of both operands (no .T relayout)
    outs = []
    for kh in range(KV):
        qg = jnp.concatenate(
            [xq[:, (kh * REP + r) * HD:(kh * REP + r + 1) * HD] for r in range(REP)],
            axis=0).astype(jnp.bfloat16)                         # (REP*S, HD)
        kg = xk[:, kh * HD:(kh + 1) * HD].astype(jnp.bfloat16)   # (S, HD)
        vg = xv[:, kh * HD:(kh + 1) * HD].astype(jnp.bfloat16)   # (S, HD)
        s = jax.lax.dot_general(qg, kg, dn,
                                preferred_element_type=jnp.float32) + bias2  # (REP*S, S)
        m = jnp.max(s, axis=-1, keepdims=True)
        p = jnp.exp(s - m)                                       # unnormalized, f32
        l = jnp.sum(p, axis=-1, keepdims=True)
        og = jnp.dot(p.astype(jnp.bfloat16), vg,
                     preferred_element_type=jnp.float32)         # (REP*S, HD)
        og = og * pl.reciprocal(l, approx=True)                  # normalize after P@V (EUP)
        outs.extend(og[r * S:(r + 1) * S, :] for r in range(REP))
    attn = jnp.concatenate(outs, axis=-1).astype(jnp.bfloat16)   # (S, H*HD)

    # --- fused output projection + residual (f32) ---
    h2 = x + jnp.dot(attn, wo_ref[...], preferred_element_type=jnp.float32)

    # --- ffn_norm (RMSNorm) + SwiGLU, w1|w3 fused into one exactly-128-lane matmul ---
    fn = norms_ref[1:2, :]
    var2 = jnp.mean(h2 * h2, axis=-1, keepdims=True)
    g = (h2 * jax.lax.rsqrt(var2 + EPS) * fn).astype(jnp.bfloat16)
    ab = jnp.dot(g, w13_ref[...], preferred_element_type=jnp.float32)   # (S, 2*HIDDEN)
    a = ab[:, :HIDDEN]
    b = ab[:, HIDDEN:]
    u = (a * jax.nn.sigmoid(a) * b).astype(jnp.bfloat16)                # silu(a)*b in f32
    ff = jnp.dot(u, w2_ref[...], preferred_element_type=jnp.float32)    # (S, DIM)

    o_ref[...] = h2 + ff


@jax.jit
def transformer_block(x, wqkv, wo, w13, w2, norms, tbl):
    # Whole-array VMEM blocks, no grid: everything fits in a handful of vregs at this size.
    return pl.pallas_call(
        transformer_block_kernel,
        out_shape=jax.ShapeDtypeStruct((S, DIM), jnp.float32),
        in_specs=[pl.BlockSpec(memory_space=pltpu.MemorySpace.VMEM)] * 7,
        out_specs=pl.BlockSpec(memory_space=pltpu.MemorySpace.VMEM),
    )(x, wqkv, wo, w13, w2, norms, tbl)


# ---------------- pure-JAX f32 reference (mirrors the PyTorch module) ----------------
def _rope_ref(v, cos2, sin2):
    # v: (S, n, HD); interleaved complex pairs like torch.view_as_complex
    v2 = v.reshape(S, -1, HD // 2, 2)
    vr, vi = v2[..., 0], v2[..., 1]
    c = cos2[:, None, :]
    s = sin2[:, None, :]
    outr = vr * c - vi * s
    outi = vr * s + vi * c
    return jnp.stack([outr, outi], axis=-1).reshape(S, -1, HD)


def reference_forward(x, Wq, Wk, Wv, Wo, W1, W2, W3, an, fn, cos2, sin2):
    def rmsnorm(v, w):
        return v * jax.lax.rsqrt(jnp.mean(v * v, -1, keepdims=True) + EPS) * w
    h = rmsnorm(x, an)
    xq = (h @ Wq.T).reshape(S, H, HD)
    xk = (h @ Wk.T).reshape(S, KV, HD)
    xv = (h @ Wv.T).reshape(S, KV, HD)
    xq = _rope_ref(xq, cos2, sin2)
    xk = _rope_ref(xk, cos2, sin2)
    k = jnp.repeat(xk, H // KV, axis=1)
    v = jnp.repeat(xv, H // KV, axis=1)
    scores = jnp.einsum('qhd,khd->hqk', xq, k) * (HD ** -0.5)
    causal = jnp.tril(jnp.ones((S, S), bool))
    scores = jnp.where(causal[None], scores, -jnp.inf)
    p = jax.nn.softmax(scores, axis=-1)
    out = jnp.einsum('hqk,khd->qhd', p, v).reshape(S, H * HD)
    h2 = x + out @ Wo.T
    g = rmsnorm(h2, fn)
    ff = (jax.nn.silu(g @ W1.T) * (g @ W3.T)) @ W2.T
    return h2 + ff


if __name__ == "__main__":
    key = jax.random.PRNGKey(0)
    ks = jax.random.split(key, 9)

    def init(k, shape):
        return jax.random.normal(k, shape, jnp.float32) * 0.05

    x = jax.random.normal(ks[0], (S, DIM), jnp.float32)

    # PyTorch nn.Linear weights: (out_features, in_features), no bias
    Wq = init(ks[1], (H * HD, DIM))
    Wk = init(ks[2], (KV * HD, DIM))
    Wv = init(ks[3], (KV * HD, DIM))
    Wo = init(ks[4], (DIM, H * HD))
    W1 = init(ks[5], (HIDDEN, DIM))
    W2 = init(ks[6], (DIM, HIDDEN))
    W3 = init(ks[7], (HIDDEN, DIM))
    an = jnp.ones((DIM,), jnp.float32)   # attention_norm.weight
    fn = jnp.ones((DIM,), jnp.float32)   # ffn_norm.weight

    # ---- kernel weight prep (one-time, outside the jitted call) ----
    # Half-rotated RoPE basis: per-head column order [real | imag]; the swapped basis
    # [imag | real] is carried as extra columns of the fused QKV weight so the in-kernel
    # half-swap disappears.  Applied identically to Q and K => scores unchanged.
    # Wv / Wo remain unpermuted.
    perm_r = list(range(0, HD, 2)) + list(range(1, HD, 2))
    perm_s = list(range(1, HD, 2)) + list(range(0, HD, 2))
    q_cols_r = np.array([hh * HD + p for hh in range(H) for p in perm_r])
    q_cols_s = np.array([hh * HD + p for hh in range(H) for p in perm_s])
    k_cols_r = np.array([kh * HD + p for kh in range(KV) for p in perm_r])
    k_cols_s = np.array([kh * HD + p for kh in range(KV) for p in perm_s])

    scale = HD ** -0.5
    WqT = Wq.T * scale                   # softmax scale baked into Q columns
    WkT, WvT = Wk.T, Wv.T
    wqkv = jnp.concatenate(
        [WqT[:, q_cols_r], WkT[:, k_cols_r], WvT,
         WqT[:, q_cols_s], WkT[:, k_cols_s]], axis=1).astype(jnp.bfloat16)  # (DIM, 112)
    wo_f = Wo.T.astype(jnp.bfloat16)                                        # (H*HD, DIM)
    w13 = jnp.concatenate([W1.T, W3.T], axis=1).astype(jnp.bfloat16)        # (DIM, 128)
    w2_f = W2.T.astype(jnp.bfloat16)                                        # (HIDDEN, DIM)
    norms = jnp.stack([an, fn], axis=0)                                     # (2, DIM)

    # rotary tables (freqs_cis equivalent): half layout, per-head tiled; sin carries the
    # [-, +] sign pattern.  Packed together with the (constant) causal bias in one buffer.
    freqs = 1.0 / (ROPE_THETA ** (jnp.arange(0, HD, 2, dtype=jnp.float32) / HD))
    ang = jnp.outer(jnp.arange(S, dtype=jnp.float32), freqs)                # (S, HD/2)
    cos2, sin2 = jnp.cos(ang), jnp.sin(ang)
    cos_h = jnp.concatenate([cos2, cos2], axis=-1)                          # (S, HD)
    sin_h = jnp.concatenate([-sin2, sin2], axis=-1)                         # (S, HD)
    cossin = jnp.concatenate(
        [jnp.tile(cos_h, (1, H)), jnp.tile(cos_h, (1, KV)),
         jnp.tile(sin_h, (1, H)), jnp.tile(sin_h, (1, KV))], axis=-1)       # (S, 96)

    bias = np.where(np.arange(S)[:, None] >= np.arange(S)[None, :],
                    0.0, NEG_INF).astype(np.float32)                        # (S, S) causal
    tbl = jnp.zeros((REP * S, TBL_W), jnp.float32)
    tbl = tbl.at[0:S, 0:2 * (QW + KW)].set(cossin)
    tbl = tbl.at[:, 2 * (QW + KW):].set(jnp.asarray(np.tile(bias, (REP, 1))))

    out = transformer_block(x, wqkv, wo_f, w13, w2_f, norms, tbl)
    out = jax.block_until_ready(out)

    ref = reference_forward(x, Wq, Wk, Wv, Wo, W1, W2, W3, an, fn, cos2, sin2)
    # bf16 matmul inputs + approx reciprocal => looser tolerance than the f32 reference
    assert jnp.allclose(out, ref, atol=2e-2, rtol=2e-2), "mismatch vs JAX reference"

    print("KERNEL_OK")
</pallas_src>

<mosaic_0001>
module attributes {stable_mosaic.version = 11 : i64} {
  func.func @transformer_block_kernel(%arg0: memref<8x32xf32, #tpu.memory_space<vmem>>, %arg1: memref<32x112xbf16, #tpu.memory_space<vmem>>, %arg2: memref<32x32xbf16, #tpu.memory_space<vmem>>, %arg3: memref<32x128xbf16, #tpu.memory_space<vmem>>, %arg4: memref<64x32xbf16, #tpu.memory_space<vmem>>, %arg5: memref<2x32xf32, #tpu.memory_space<vmem>>, %arg6: memref<16x104xf32, #tpu.memory_space<vmem>>, %arg7: memref<8x32xf32, #tpu.memory_space<vmem>>) attributes {dimension_semantics = [], scalar_prefetch = 0 : i64, scratch_operands = 0 : i64, tpu.core_type = #tpu.core_type<tc>} {
    %c0 = arith.constant 0 : index
    %c0_0 = arith.constant 0 : index
    %0 = vector.load %arg0[%c0, %c0_0] : memref<8x32xf32, #tpu.memory_space<vmem>>, vector<8x32xf32>
    %c0_1 = arith.constant 0 : index
    %c0_2 = arith.constant 0 : index
    %1 = vector.load %arg5[%c0_1, %c0_2] : memref<2x32xf32, #tpu.memory_space<vmem>>, vector<1x32xf32>
    %2 = arith.mulf %0, %0 : vector<8x32xf32>
    %cst = arith.constant dense<0.000000e+00> : vector<8xf32>
    %3 = vector.multi_reduction <add>, %2, %cst [1] : vector<8x32xf32> to vector<8xf32>
    %4 = vector.shape_cast %3 : vector<8xf32> to vector<8x1xf32>
    %cst_3 = arith.constant 3.200000e+01 : f32
    %5 = vector.broadcast %cst_3 : f32 to vector<8x1xf32>
    %6 = arith.divf %4, %5 : vector<8x1xf32>
    %cst_4 = arith.constant 9.99999997E-7 : f32
    %7 = vector.broadcast %cst_4 : f32 to vector<8x1xf32>
    %8 = arith.addf %6, %7 : vector<8x1xf32>
    %9 = math.rsqrt %8 : vector<8x1xf32>
    %10 = vector.broadcast %9 : vector<8x1xf32> to vector<8x32xf32>
    %11 = arith.mulf %0, %10 : vector<8x32xf32>
    %12 = vector.broadcast %1 : vector<1x32xf32> to vector<8x32xf32>
    %13 = arith.mulf %11, %12 : vector<8x32xf32>
    %14 = arith.truncf %13 : vector<8x32xf32> to vector<8x32xbf16>
    %c0_5 = arith.constant 0 : index
    %c0_6 = arith.constant 0 : index
    %15 = vector.load %arg1[%c0_5, %c0_6] : memref<32x112xbf16, #tpu.memory_space<vmem>>, vector<32x112xbf16>
    %cst_7 = arith.constant dense<0.000000e+00> : vector<8x112xf32>
    %16 = tpu.matmul %14, %15, %cst_7 {dimension_numbers = #tpu.dot_dimension_numbers<[1], [0], [0], [1], [0, 0, 1, 1], [], []>} : vector<8x32xbf16>, vector<32x112xbf16>, vector<8x112xf32> -> vector<8x112xf32>
    %c0_8 = arith.constant 0 : index
    %c0_9 = arith.constant 0 : index
    %17 = vector.load %arg6[%c0_8, %c0_9] : memref<16x104xf32, #tpu.memory_space<vmem>>, vector<8x48xf32>
    %c0_10 = arith.constant 0 : index
    %c48 = arith.constant 48 : index
    %18 = vector.load %arg6[%c0_10, %c48] : memref<16x104xf32, #tpu.memory_space<vmem>>, vector<8x48xf32>
    %19 = vector.extract_strided_slice %16 {offsets = [0, 0], sizes = [8, 48], strides = [1, 1]} : vector<8x112xf32> to vector<8x48xf32>
    %20 = arith.mulf %19, %17 : vector<8x48xf32>
    %21 = vector.extract_strided_slice %16 {offsets = [0, 64], sizes = [8, 48], strides = [1, 1]} : vector<8x112xf32> to vector<8x48xf32>
    %22 = arith.mulf %21, %18 : vector<8x48xf32>
    %23 = arith.addf %20, %22 : vector<8x48xf32>
    %24 = vector.extract_strided_slice %23 {offsets = [0, 0], sizes = [8, 32], strides = [1, 1]} : vector<8x48xf32> to vector<8x32xf32>
    %25 = vector.extract_strided_slice %23 {offsets = [0, 32], sizes = [8, 16], strides = [1, 1]} : vector<8x48xf32> to vector<8x16xf32>
    %26 = vector.extract_strided_slice %16 {offsets = [0, 48], sizes = [8, 16], strides = [1, 1]} : vector<8x112xf32> to vector<8x16xf32>
    %c0_11 = arith.constant 0 : index
    %c96 = arith.constant 96 : index
    %27 = vector.load %arg6[%c0_11, %c96] : memref<16x104xf32, #tpu.memory_space<vmem>>, vector<16x8xf32>
    %28 = vector.extract_strided_slice %24 {offsets = [0, 0], sizes = [8, 8], strides = [1, 1]} : vector<8x32xf32> to vector<8x8xf32>
    %29 = vector.extract_strided_slice %24 {offsets = [0, 8], sizes = [8, 8], strides = [1, 1]} : vector<8x32xf32> to vector<8x8xf32>
    %30 = tpu.concatenate %28, %29 in 0 : vector<8x8xf32>, vector<8x8xf32> -> vector<16x8xf32>
    %31 = arith.truncf %30 : vector<16x8xf32> to vector<16x8xbf16>
    %32 = vector.extract_strided_slice %25 {offsets = [0, 0], sizes = [8, 8], strides = [1, 1]} : vector<8x16xf32> to vector<8x8xf32>
    %33 = arith.truncf %32 : vector<8x8xf32> to vector<8x8xbf16>
    %34 = vector.extract_strided_slice %26 {offsets = [0, 0], sizes = [8, 8], strides = [1, 1]} : vector<8x16xf32> to vector<8x8xf32>
    %35 = arith.truncf %34 : vector<8x8xf32> to vector<8x8xbf16>
    %cst_12 = arith.constant dense<0.000000e+00> : vector<16x8xf32>
    %36 = tpu.matmul %31, %33, %cst_12 {dimension_numbers = #tpu.dot_dimension_numbers<[1], [1], [0], [0], [0, 0, 1, 0], [], []>} : vector<16x8xbf16>, vector<8x8xbf16>, vector<16x8xf32> -> vector<16x8xf32>
    %37 = arith.addf %36, %27 : vector<16x8xf32>
    %cst_13 = arith.constant dense<0xFF800000> : vector<16xf32>
    %38 = vector.multi_reduction <maximumf>, %37, %cst_13 [1] : vector<16x8xf32> to vector<16xf32>
    %39 = vector.shape_cast %38 : vector<16xf32> to vector<16x1xf32>
    %40 = vector.broadcast %39 : vector<16x1xf32> to vector<16x8xf32>
    %41 = arith.subf %37, %40 : vector<16x8xf32>
    %42 = math.exp %41 : vector<16x8xf32>
    %cst_14 = arith.constant dense<0.000000e+00> : vector<16xf32>
    %43 = vector.multi_reduction <add>, %42, %cst_14 [1] : vector<16x8xf32> to vector<16xf32>
    %44 = vector.shape_cast %43 : vector<16xf32> to vector<16x1xf32>
    %45 = arith.truncf %42 : vector<16x8xf32> to vector<16x8xbf16>
    %cst_15 = arith.constant dense<0.000000e+00> : vector<16x8xf32>
    %46 = tpu.matmul %45, %35, %cst_15 {dimension_numbers = #tpu.dot_dimension_numbers<[1], [0], [0], [1], [0, 0, 1, 1], [], []>} : vector<16x8xbf16>, vector<8x8xbf16>, vector<16x8xf32> -> vector<16x8xf32>
    %47 = tpu.reciprocal %44 {approx = true} : vector<16x1xf32> -> vector<16x1xf32>
    %48 = vector.broadcast %47 : vector<16x1xf32> to vector<16x8xf32>
    %49 = arith.mulf %46, %48 : vector<16x8xf32>
    %50 = vector.extract_strided_slice %49 {offsets = [0, 0], sizes = [8, 8], strides = [1, 1]} : vector<16x8xf32> to vector<8x8xf32>
    %51 = vector.extract_strided_slice %49 {offsets = [8, 0], sizes = [8, 8], strides = [1, 1]} : vector<16x8xf32> to vector<8x8xf32>
    %52 = vector.extract_strided_slice %24 {offsets = [0, 16], sizes = [8, 8], strides = [1, 1]} : vector<8x32xf32> to vector<8x8xf32>
    %53 = vector.extract_strided_slice %24 {offsets = [0, 24], sizes = [8, 8], strides = [1, 1]} : vector<8x32xf32> to vector<8x8xf32>
    %54 = tpu.concatenate %52, %53 in 0 : vector<8x8xf32>, vector<8x8xf32> -> vector<16x8xf32>
    %55 = arith.truncf %54 : vector<16x8xf32> to vector<16x8xbf16>
    %56 = vector.extract_strided_slice %25 {offsets = [0, 8], sizes = [8, 8], strides = [1, 1]} : vector<8x16xf32> to vector<8x8xf32>
    %57 = arith.truncf %56 : vector<8x8xf32> to vector<8x8xbf16>
    %58 = vector.extract_strided_slice %26 {offsets = [0, 8], sizes = [8, 8], strides = [1, 1]} : vector<8x16xf32> to vector<8x8xf32>
    %59 = arith.truncf %58 : vector<8x8xf32> to vector<8x8xbf16>
    %cst_16 = arith.constant dense<0.000000e+00> : vector<16x8xf32>
    %60 = tpu.matmul %55, %57, %cst_16 {dimension_numbers = #tpu.dot_dimension_numbers<[1], [1], [0], [0], [0, 0, 1, 0], [], []>} : vector<16x8xbf16>, vector<8x8xbf16>, vector<16x8xf32> -> vector<16x8xf32>
    %61 = arith.addf %60, %27 : vector<16x8xf32>
    %cst_17 = arith.constant dense<0xFF800000> : vector<16xf32>
    %62 = vector.multi_reduction <maximumf>, %61, %cst_17 [1] : vector<16x8xf32> to vector<16xf32>
    %63 = vector.shape_cast %62 : vector<16xf32> to vector<16x1xf32>
    %64 = vector.broadcast %63 : vector<16x1xf32> to vector<16x8xf32>
    %65 = arith.subf %61, %64 : vector<16x8xf32>
    %66 = math.exp %65 : vector<16x8xf32>
    %cst_18 = arith.constant dense<0.000000e+00> : vector<16xf32>
    %67 = vector.multi_reduction <add>, %66, %cst_18 [1] : vector<16x8xf32> to vector<16xf32>
    %68 = vector.shape_cast %67 : vector<16xf32> to vector<16x1xf32>
    %69 = arith.truncf %66 : vector<16x8xf32> to vector<16x8xbf16>
    %cst_19 = arith.constant dense<0.000000e+00> : vector<16x8xf32>
    %70 = tpu.matmul %69, %59, %cst_19 {dimension_numbers = #tpu.dot_dimension_numbers<[1], [0], [0], [1], [0, 0, 1, 1], [], []>} : vector<16x8xbf16>, vector<8x8xbf16>, vector<16x8xf32> -> vector<16x8xf32>
    %71 = tpu.reciprocal %68 {approx = true} : vector<16x1xf32> -> vector<16x1xf32>
    %72 = vector.broadcast %71 : vector<16x1xf32> to vector<16x8xf32>
    %73 = arith.mulf %70, %72 : vector<16x8xf32>
    %74 = vector.extract_strided_slice %73 {offsets = [0, 0], sizes = [8, 8], strides = [1, 1]} : vector<16x8xf32> to vector<8x8xf32>
    %75 = vector.extract_strided_slice %73 {offsets = [8, 0], sizes = [8, 8], strides = [1, 1]} : vector<16x8xf32> to vector<8x8xf32>
    %76 = tpu.concatenate %50, %51, %74, %75 in 1 : vector<8x8xf32>, vector<8x8xf32>, vector<8x8xf32>, vector<8x8xf32> -> vector<8x32xf32>
    %77 = arith.truncf %76 : vector<8x32xf32> to vector<8x32xbf16>
    %c0_20 = arith.constant 0 : index
    %c0_21 = arith.constant 0 : index
    %78 = vector.load %arg2[%c0_20, %c0_21] : memref<32x32xbf16, #tpu.memory_space<vmem>>, vector<32x32xbf16>
    %cst_22 = arith.constant dense<0.000000e+00> : vector<8x32xf32>
    %79 = tpu.matmul %77, %78, %cst_22 {dimension_numbers = #tpu.dot_dimension_numbers<[1], [0], [0], [1], [0, 0, 1, 1], [], []>} : vector<8x32xbf16>, vector<32x32xbf16>, vector<8x32xf32> -> vector<8x32xf32>
    %80 = arith.addf %0, %79 : vector<8x32xf32>
    %c1 = arith.constant 1 : index
    %c0_23 = arith.constant 0 : index
    %81 = vector.load %arg5[%c1, %c0_23] : memref<2x32xf32, #tpu.memory_space<vmem>>, vector<1x32xf32>
    %82 = arith.mulf %80, %80 : vector<8x32xf32>
    %cst_24 = arith.constant dense<0.000000e+00> : vector<8xf32>
    %83 = vector.multi_reduction <add>, %82, %cst_24 [1] : vector<8x32xf32> to vector<8xf32>
    %84 = vector.shape_cast %83 : vector<8xf32> to vector<8x1xf32>
    %cst_25 = arith.constant 3.200000e+01 : f32
    %85 = vector.broadcast %cst_25 : f32 to vector<8x1xf32>
    %86 = arith.divf %84, %85 : vector<8x1xf32>
    %cst_26 = arith.constant 9.99999997E-7 : f32
    %87 = vector.broadcast %cst_26 : f32 to vector<8x1xf32>
    %88 = arith.addf %86, %87 : vector<8x1xf32>
    %89 = math.rsqrt %88 : vector<8x1xf32>
    %90 = vector.broadcast %89 : vector<8x1xf32> to vector<8x32xf32>
    %91 = arith.mulf %80, %90 : vector<8x32xf32>
    %92 = vector.broadcast %81 : vector<1x32xf32> to vector<8x32xf32>
    %93 = arith.mulf %91, %92 : vector<8x32xf32>
    %94 = arith.truncf %93 : vector<8x32xf32> to vector<8x32xbf16>
    %c0_27 = arith.constant 0 : index
    %c0_28 = arith.constant 0 : index
    %95 = vector.load %arg3[%c0_27, %c0_28] : memref<32x128xbf16, #tpu.memory_space<vmem>>, vector<32x128xbf16>
    %cst_29 = arith.constant dense<0.000000e+00> : vector<8x128xf32>
    %96 = tpu.matmul %94, %95, %cst_29 {dimension_numbers = #tpu.dot_dimension_numbers<[1], [0], [0], [1], [0, 0, 1, 1], [], []>} : vector<8x32xbf16>, vector<32x128xbf16>, vector<8x128xf32> -> vector<8x128xf32>
    %97 = vector.extract_strided_slice %96 {offsets = [0, 0], sizes = [8, 64], strides = [1, 1]} : vector<8x128xf32> to vector<8x64xf32>
    %98 = vector.extract_strided_slice %96 {offsets = [0, 64], sizes = [8, 64], strides = [1, 1]} : vector<8x128xf32> to vector<8x64xf32>
    %99 = arith.negf %97 : vector<8x64xf32>
    %100 = math.exp %99 : vector<8x64xf32>
    %cst_30 = arith.constant 1.000000e+00 : f32
    %101 = vector.broadcast %cst_30 : f32 to vector<8x64xf32>
    %102 = arith.addf %101, %100 : vector<8x64xf32>
    %103 = arith.divf %101, %102 : vector<8x64xf32>
    %104 = arith.mulf %97, %103 : vector<8x64xf32>
    %105 = arith.mulf %104, %98 : vector<8x64xf32>
    %106 = arith.truncf %105 : vector<8x64xf32> to vector<8x64xbf16>
    %c0_31 = arith.constant 0 : index
    %c0_32 = arith.constant 0 : index
    %107 = vector.load %arg4[%c0_31, %c0_32] : memref<64x32xbf16, #tpu.memory_space<vmem>>, vector<64x32xbf16>
    %cst_33 = arith.constant dense<0.000000e+00> : vector<8x32xf32>
    %108 = tpu.matmul %106, %107, %cst_33 {dimension_numbers = #tpu.dot_dimension_numbers<[1], [0], [0], [1], [0, 0, 1, 1], [], []>} : vector<8x64xbf16>, vector<64x32xbf16>, vector<8x32xf32> -> vector<8x32xf32>
    %109 = arith.addf %80, %108 : vector<8x32xf32>
    %c0_34 = arith.constant 0 : index
    %c0_35 = arith.constant 0 : index
    %110 = vector.load %arg7[%c0_34, %c0_35] : memref<8x32xf32, #tpu.memory_space<vmem>>, vector<8x32xf32>
    tpu.vector_store %arg7[%c0_34, %c0_35], %109 {strides = array<i32>} : memref<8x32xf32, #tpu.memory_space<vmem>>, vector<8x32xf32>,
    return
  }
}

</mosaic_0001>

<llo_original>
// kernel: transformer_block.1
$region0: #{transformer_block.1}
  #allocation0 [shape = 'u32[]', space=smem, size = 0x4, offset = 0x4, fixed_abs, tag = 'smem constant byte address 0x4 - core index']
  #allocation1 [shape = 'u32[144,128]{1,0:T(1,128)}', space=vmem, size = 0x12000, scoped, tag = 'internal scratch']
  %s0 = inlined_call_operand.hbm [shape: f32[8,32], index: 0, kind: input, shape index: {}]
  %s1 = inlined_call_operand.vmem [shape: bf16[32,112], index: 1, kind: input, shape index: {}]
  %s2 = inlined_call_operand.vmem [shape: bf16[32,32], index: 2, kind: input, shape index: {}]
  %s3 = inlined_call_operand.vmem [shape: bf16[32,128], index: 3, kind: input, shape index: {}]
  %s4 = inlined_call_operand.vmem [shape: bf16[64,32], index: 4, kind: input, shape index: {}]
  %s5 = inlined_call_operand.vmem [shape: f32[2,32], index: 5, kind: input, shape index: {}]
  %s6 = inlined_call_operand.hbm [shape: f32[16,104], index: 6, kind: input, shape index: {}]
  %s7 = inlined_call_operand.hbm [shape: f32[8,32], index: 7, kind: output, shape index: {}]
  %s8 = sld [smem:[#allocation0]]
  $region46: #{transformer_block.1} parent=0
    _
  %s10 = ssub.s32 1, %s8
  %s11 = scalar_select 0, %s10, %s8
  $region1: #{transformer_block.1} parent=0
    #allocation2 [shape = 'u8[4096]{0}', space=vmem, size = 0x1000, scoped, tag = 'input window, operand 0, single buffered']
    #allocation3 [shape = 's32[1]{0}', space=sflag, size = 0x4, scoped, tag = 'scoped memory for transformer_block.1']
    #allocation4 [shape = 's32[1]{0}', space=sflag, size = 0x4, scoped, tag = 'scoped memory for transformer_block.1']
    #allocation5 [shape = 'u8[8192]{0}', space=vmem, size = 0x2000, scoped, tag = 'input window, operand 6, single buffered']
    #allocation6 [shape = 's32[1]{0}', space=sflag, size = 0x4, scoped, tag = 'scoped memory for transformer_block.1']
    #allocation7 [shape = 'u8[4096]{0}', space=vmem, size = 0x1000, scoped, tag = 'output window, operand 0, single buffered']
    %12 = vsyncpa [#allocation3], 0
    %13 = vsyncpa [#allocation6], 0
    %14 = vsyncpa [#allocation4], 0
    // Predicated region
    $region2: #{transformer_block.1} parent=1 // pred_check
      _
    $region3: #{transformer_block.1} parent=1 // pred_check_branch
      %16 = sbr.rel (0) target = $region5
    $region4: #{transformer_block.1} parent=1 // pred_region
      %s18 = ssub.s32 128, 128
      %19 = vsyncadd [#allocation3], %s18
      %s21 = sshll.u32 [#allocation2], 4
      %s22 = int_to_ptr.vmem [resolvable:$true] %s21
      %24 = dma.hbm_to_vmem [thread:$0]  %s0, 128, %s22, [#allocation3]
    $region5: #{transformer_block.1} parent=1 // pred_fallthru
      _
    // Predicated region
    $region6: #{transformer_block.1} parent=1 // pred_check
      _
    $region7: #{transformer_block.1} parent=1 // pred_check_branch
      %26 = sbr.rel (0) target = $region9
    $region8: #{transformer_block.1} parent=1 // pred_region
      _
    $region9: #{transformer_block.1} parent=1 // pred_fallthru
      _
    // Predicated region
    $region10: #{transformer_block.1} parent=1 // pred_check
      _
    $region11: #{transformer_block.1} parent=1 // pred_check_branch
      %28 = sbr.rel (0) target = $region13
    $region12: #{transformer_block.1} parent=1 // pred_region
      _
    $region13: #{transformer_block.1} parent=1 // pred_fallthru
      _
    // Predicated region
    $region14: #{transformer_block.1} parent=1 // pred_check
      _
    $region15: #{transformer_block.1} parent=1 // pred_check_branch
      %30 = sbr.rel (0) target = $region17
    $region16: #{transformer_block.1} parent=1 // pred_region
      _
    $region17: #{transformer_block.1} parent=1 // pred_fallthru
      _
    // Predicated region
    $region18: #{transformer_block.1} parent=1 // pred_check
      _
    $region19: #{transformer_block.1} parent=1 // pred_check_branch
      %32 = sbr.rel (0) target = $region21
    $region20: #{transformer_block.1} parent=1 // pred_region
      _
    $region21: #{transformer_block.1} parent=1 // pred_fallthru
      _
    // Predicated region
    $region22: #{transformer_block.1} parent=1 // pred_check
      _
    $region23: #{transformer_block.1} parent=1 // pred_check_branch
      %34 = sbr.rel (0) target = $region25
    $region24: #{transformer_block.1} parent=1 // pred_region
      _
    $region25: #{transformer_block.1} parent=1 // pred_fallthru
      _
    // Predicated region
    $region26: #{transformer_block.1} parent=1 // pred_check
      _
    $region27: #{transformer_block.1} parent=1 // pred_check_branch
      %36 = sbr.rel (0) target = $region29
    $region28: #{transformer_block.1} parent=1 // pred_region
      %s38 = ssub.s32 256, 256
      %39 = vsyncadd [#allocation6], %s38
      %s40 = sshll.u32 [#allocation5], 4
      %s41 = int_to_ptr.vmem [resolvable:$true] %s40
      %46 = dma.hbm_to_vmem [thread:$0]  %s6, 256, %s41, [#allocation6], 128, 128, 8
    $region29: #{transformer_block.1} parent=1 // pred_fallthru
      _
    // Predicated region
    $region30: #{transformer_block.1} parent=1 // pred_check
      _
    $region31: #{transformer_block.1} parent=1 // pred_check_branch
      %48 = sbr.rel (0) target = $region33
    $region32: #{transformer_block.1} parent=1 // pred_region
      %49 = dma.done [#allocation3], 128
    $region33: #{transformer_block.1} parent=1 // pred_fallthru
      _
    // Predicated region
    $region34: #{transformer_block.1} parent=1 // pred_check
      _
    $region35: #{transformer_block.1} parent=1 // pred_check_branch
      %51 = sbr.rel (0) target = $region37
    $region36: #{transformer_block.1} parent=1 // pred_region
      %52 = dma.done [#allocation6], 256
    $region37: #{transformer_block.1} parent=1 // pred_fallthru
      _
    %v54 = vld [vmem:[#allocation2] sm:$0xff]
    %v55 = vld [vmem:[%s5] sm:$0x1]
    %v56 = vmul.f32 %v54, %v54
    %vm57 = vcmask 261120
    %v58 = vsel %vm57, %v56, 0.0
    %59 = vadd.xlane.f32.xlu0 %v58
    %v60 = vpop.xlane.xlu0 %59
    %v61 = vrcp.pop 32.0
    %v62 = vmul.f32 %v60, %v61
    %v63 = vadd.f32 %v62, 1e-06
    %v64 = vrsqrt.pop %v63
    %v65 = vmul.f32 %v54, %v64
    %v66 = vlaneseq
    %v67 = vshrl.u32 %v66, 7
    %v68 = vsub.s32 0, %v67
    %v69 = vrot.slane %v55, %v68
    %v70 = vmul.f32 %v65, %v69
    %v71 = vpack.c.bf16 %v70, %v70
    %v72 = vld [vmem:[%s1] sm:$0xf]
    %v73 = vld [vmem:[%s1 + $0x4] sm:$0xf]
    %v74 = vld [vmem:[%s1 + $0x8] sm:$0xf]
    %v75 = vld [vmem:[%s1 + $0xc] sm:$0xf]
    %v80 = vunpack.c.l.b16 %v72
    %v81 = vunpack.c.l.b16 %v73
    %v82 = vunpack.c.l.b16 %v74
    %v83 = vunpack.c.l.b16 %v75
    %v84 = vpack.c.b16 %v81, %v80
    %v85 = vpack.c.b16 %v83, %v82
    %v89 = vsel %vm57, %v71, 0
    %91 = vmatprep.subr.bf16.mxu0 0
    %92 = vmatpush1.bf16.msra.mxu0 0
    %93 = vmatprep.subr.bf16.mxu0 0
    %94 = vmatpush1.bf16.msra.mxu0 0
    %95 = vmatprep.subr.bf16.mxu0 0
    %96 = vmatpush1.bf16.msra.mxu0 0
    %97 = vmatprep.subr.bf16.mxu0 0
    %98 = vmatpush1.bf16.msra.mxu0 0
    %99 = vmatprep.subr.bf16.mxu0 0
    %100 = vmatpush1.bf16.msra.mxu0 0
    %101 = vmatprep.subr.bf16.mxu0 0
    %102 = vmatpush1.bf16.msra.mxu0 0
    %103 = vmatprep.subr.bf16.mxu0 0
    %104 = vmatpush1.bf16.msra.mxu0 %v85
    %105 = vmatprep.subr.bf16.mxu0 0
    %106 = vmatpush1.bf16.msra.mxu0 %v84
    %107 = vmatprep.subr.bf16.mxu0 0
    %108 = vmatpush2.bf16.msra.mxu0 0
    %109 = vmatprep.subr.bf16.mxu0 0
    %110 = vmatpush2.bf16.msra.mxu0 0
    %111 = vmatprep.subr.bf16.mxu0 0
    %112 = vmatpush2.bf16.msra.mxu0 0
    %113 = vmatprep.subr.bf16.mxu0 0
    %114 = vmatpush2.bf16.msra.mxu0 0
    %115 = vmatprep.subr.bf16.mxu0 0
    %116 = vmatpush2.bf16.msra.mxu0 0
    %117 = vmatprep.subr.bf16.mxu0 0
    %118 = vmatpush2.bf16.msra.mxu0 0
    %119 = vmatprep.subr.bf16.mxu0 0
    %120 = vmatpush2.bf16.msra.mxu0 0
    %121 = vmatprep.subr.bf16.mxu0 0
    %122 = vmatpush2.bf16.msra.mxu0 0
    %123 = vmatprep.mubr.bf16.mxu0 0
    %124 = vmatmul.mubr.bf16.gmra.mxu0 %v89
    %v125 = vpop.f32.mrf.mxu0
    %v126 = vadd.f32 0.0, %v125
    %v127 = vpop.f32.mrf.mxu0
    %v128 = vpop.f32.mrf.mxu0
    %v129 = vpop.f32.mrf.mxu0
    %130 = vdwg.mxu0
    %v131 = vld [vmem:[#allocation5] sm:$0xff]
    %v132 = vmul.f32 %v126, %v131
    %134 = vrot.lane.b32.xlu0 %v131, 16
    %v135 = vpop.permute.xlu0 %134
    %v137 = vmul.f32 %v126, %v135
    %139 = vrot.lane.b32.xlu0 %v137, 64
    %v140 = vpop.permute.xlu0 %139
    %v142 = vadd.f32 %v132, %v140
    %v143 = vld [vmem:[#allocation5 + $0x8] sm:$0xff]
    %145 = vrot.lane.b32.xlu0 %v142, 120
    %v146 = vpop.permute.xlu0 %145
    %v148 = vpack.c.bf16 %v146, %v142
    %v149 = vpack.c.bf16 %v142, %v142
    %v150 = vpack.c.bf16 %v126, %v126
    %152 = vrot.lane.b32.xlu0 %v149, 96
    %v153 = vpop.permute.xlu0 %152
    %155 = vrot.lane.b32.xlu0 %v131, 32
    %v156 = vpop.permute.xlu0 %155
    %157 = vrot.lane.b32.xlu0 %v143, 32
    %v158 = vpop.permute.xlu0 %157
    %vm161 = vcmask 64512
    %v163 = vsel %vm161, %v148, 0
    %v166 = vsel %vm161, %v153, 0
    %168 = vmatprep.subr.bf16.mxu0 0
    %169 = vmatpush1.bf16.xpose.msra.mxu0 0
    %170 = vmatprep.subr.bf16.mxu0 0
    %171 = vmatpush1.bf16.xpose.msra.mxu0 0
    %172 = vmatprep.subr.bf16.mxu0 0
    %173 = vmatpush1.bf16.xpose.msra.mxu0 0
    %174 = vmatprep.subr.bf16.mxu0 0
    %175 = vmatpush1.bf16.xpose.msra.mxu0 0
    %176 = vmatprep.subr.bf16.mxu0 0
    %177 = vmatpush1.bf16.xpose.msra.mxu0 0
    %178 = vmatprep.subr.bf16.mxu0 0
    %179 = vmatpush1.bf16.xpose.msra.mxu0 0
    %180 = vmatprep.subr.bf16.mxu0 0
    %181 = vmatpush1.bf16.xpose.msra.mxu0 0
    %182 = vmatprep.subr.bf16.mxu0 0
    %183 = vmatpush1.bf16.xpose.msra.mxu0 %v166
    %184 = vmatprep.subr.bf16.mxu0 0
    %185 = vmatpush2.bf16.xpose.msra.mxu0 0
    %186 = vmatprep.subr.bf16.mxu0 0
    %187 = vmatpush2.bf16.xpose.msra.mxu0 0
    %188 = vmatprep.subr.bf16.mxu0 0
    %189 = vmatpush2.bf16.xpose.msra.mxu0 0
    %190 = vmatprep.subr.bf16.mxu0 0
    %191 = vmatpush2.bf16.xpose.msra.mxu0 0
    %192 = vmatprep.subr.bf16.mxu0 0
    %193 = vmatpush2.bf16.xpose.msra.mxu0 0
    %194 = vmatprep.subr.bf16.mxu0 0
    %195 = vmatpush2.bf16.xpose.msra.mxu0 0
    %196 = vmatprep.subr.bf16.mxu0 0
    %197 = vmatpush2.bf16.xpose.msra.mxu0 0
    %198 = vmatprep.subr.bf16.mxu0 0
    %199 = vmatpush2.bf16.xpose.msra.mxu0 0
    %200 = vmatprep.mubr.bf16.mxu0 0
    %201 = vmatmul.mubr.bf16.gmra.mxu0 %v163
    %v202 = vpop.f32.mrf.mxu0
    %v203 = vadd.f32 %v156, %v202
    %v204 = vpop.f32.mrf.mxu0
    %v205 = vpop.f32.mrf.mxu0
    %v206 = vadd.f32 %v158, %v205
    %v207 = vpop.f32.mrf.mxu0
    %208 = vdwg.mxu0
    %v209 = vsel %vm161, %v203, -inf
    %210 = vmax.xlane.f32.xlu0 %v209
    %v211 = vpop.xlane.xlu0 %210
    %v212 = vsel %vm161, %v206, -inf
    %213 = vmax.xlane.f32.xlu0 %v212
    %v214 = vpop.xlane.xlu0 %213
    %v215 = vsub.f32 %v203, %v211
    %v216 = vsub.f32 %v206, %v214
    %v217 = vmul.f32 %v215, 1.442695
    %v218 = vpow.pop %v217
    %v219 = vmul.f32 %v216, 1.442695
    %v220 = vpow.pop %v219
    %v221 = vsel %vm161, %v218, 0.0
    %222 = vadd.xlane.f32.xlu0 %v221
    %v223 = vpop.xlane.xlu0 %222
    %v224 = vsel %vm161, %v220, 0.0
    %225 = vadd.xlane.f32.xlu0 %v224
    %v226 = vpop.xlane.xlu0 %225
    %v227 = vpack.c.bf16 %v220, %v218
    %229 = vrot.lane.b32.xlu0 %v150, 80
    %v230 = vpop.permute.xlu0 %229
    %v232 = vsel %vm161, %v227, 0
    %vm234 = vcmask 1043456
    %v236 = vsel %vm234, %v230, 0
    %238 = vmatprep.subr.bf16.mxu0 0
    %239 = vmatpush1.bf16.msra.mxu0 0
    %240 = vmatprep.subr.bf16.mxu0 0
    %241 = vmatpush1.bf16.msra.mxu0 0
    %242 = vmatprep.subr.bf16.mxu0 0
    %243 = vmatpush1.bf16.msra.mxu0 0
    %244 = vmatprep.subr.bf16.mxu0 0
    %245 = vmatpush1.bf16.msra.mxu0 0
    %246 = vmatprep.subr.bf16.mxu0 0
    %247 = vmatpush1.bf16.msra.mxu0 0
    %248 = vmatprep.subr.bf16.mxu0 0
    %249 = vmatpush1.bf16.msra.mxu0 0
    %250 = vmatprep.subr.bf16.mxu0 0
    %251 = vmatpush1.bf16.msra.mxu0 0
    %252 = vmatprep.subr.bf16.mxu0 0
    %253 = vmatpush1.bf16.msra.mxu0 %v236
    %254 = vmatprep.subr.bf16.mxu0 0
    %255 = vmatpush2.bf16.msra.mxu0 0
    %256 = vmatprep.subr.bf16.mxu0 0
    %257 = vmatpush2.bf16.msra.mxu0 0
    %258 = vmatprep.subr.bf16.mxu0 0
    %259 = vmatpush2.bf16.msra.mxu0 0
    %260 = vmatprep.subr.bf16.mxu0 0
    %261 = vmatpush2.bf16.msra.mxu0 0
    %262 = vmatprep.subr.bf16.mxu0 0
    %263 = vmatpush2.bf16.msra.mxu0 0
    %264 = vmatprep.subr.bf16.mxu0 0
    %265 = vmatpush2.bf16.msra.mxu0 0
    %266 = vmatprep.subr.bf16.mxu0 0
    %267 = vmatpush2.bf16.msra.mxu0 0
    %268 = vmatprep.subr.bf16.mxu0 0
    %269 = vmatpush2.bf16.msra.mxu0 0
    %270 = vmatprep.mubr.bf16.mxu0 0
    %271 = vmatmul.mubr.bf16.gmra.mxu0 %v232
    %v272 = vpop.f32.mrf.mxu0
    %v273 = vadd.f32 0.0, %v272
    %v274 = vpop.f32.mrf.mxu0
    %v275 = vpop.f32.mrf.mxu0
    %v276 = vadd.f32 0.0, %v275
    %v277 = vpop.f32.mrf.mxu0
    %278 = vdwg.mxu0
    %v279 = vrcp.pop %v223
    %v280 = vrcp.pop %v226
    %v281 = vmul.f32 %v273, %v279
    %v282 = vmul.f32 %v276, %v280
    %284 = vrot.lane.b32.xlu0 %v148, 112
    %v285 = vpop.permute.xlu0 %284
    %286 = vrot.lane.b32.xlu0 %v149, 88
    %v287 = vpop.permute.xlu0 %286
    %v289 = vsel %vm161, %v285, 0
    %v292 = vsel %vm161, %v287, 0
    %294 = vmatprep.subr.bf16.mxu0 0
    %295 = vmatpush1.bf16.xpose.msra.mxu0 0
    %296 = vmatprep.subr.bf16.mxu0 0
    %297 = vmatpush1.bf16.xpose.msra.mxu0 0
    %298 = vmatprep.subr.bf16.mxu0 0
    %299 = vmatpush1.bf16.xpose.msra.mxu0 0
    %300 = vmatprep.subr.bf16.mxu0 0
    %301 = vmatpush1.bf16.xpose.msra.mxu0 0
    %302 = vmatprep.subr.bf16.mxu0 0
    %303 = vmatpush1.bf16.xpose.msra.mxu0 0
    %304 = vmatprep.subr.bf16.mxu0 0
    %305 = vmatpush1.bf16.xpose.msra.mxu0 0
    %306 = vmatprep.subr.bf16.mxu0 0
    %307 = vmatpush1.bf16.xpose.msra.mxu0 0
    %308 = vmatprep.subr.bf16.mxu0 0
    %309 = vmatpush1.bf16.xpose.msra.mxu0 %v292
    %310 = vmatprep.subr.bf16.mxu0 0
    %311 = vmatpush2.bf16.xpose.msra.mxu0 0
    %312 = vmatprep.subr.bf16.mxu0 0
    %313 = vmatpush2.bf16.xpose.msra.mxu0 0
    %314 = vmatprep.subr.bf16.mxu0 0
    %315 = vmatpush2.bf16.xpose.msra.mxu0 0
    %316 = vmatprep.subr.bf16.mxu0 0
    %317 = vmatpush2.bf16.xpose.msra.mxu0 0
    %318 = vmatprep.subr.bf16.mxu0 0
    %319 = vmatpush2.bf16.xpose.msra.mxu0 0
    %320 = vmatprep.subr.bf16.mxu0 0
    %321 = vmatpush2.bf16.xpose.msra.mxu0 0
    %322 = vmatprep.subr.bf16.mxu0 0
    %323 = vmatpush2.bf16.xpose.msra.mxu0 0
    %324 = vmatprep.subr.bf16.mxu0 0
    %325 = vmatpush2.bf16.xpose.msra.mxu0 0
    %326 = vmatprep.mubr.bf16.mxu0 0
    %327 = vmatmul.mubr.bf16.gmra.mxu0 %v289
    %v328 = vpop.f32.mrf.mxu0
    %v329 = vadd.f32 %v156, %v328
    %v330 = vpop.f32.mrf.mxu0
    %v331 = vpop.f32.mrf.mxu0
    %v332 = vadd.f32 %v158, %v331
    %v333 = vpop.f32.mrf.mxu0
    %334 = vdwg.mxu0
    %v335 = vsel %vm161, %v329, -inf
    %336 = vmax.xlane.f32.xlu0 %v335
    %v337 = vpop.xlane.xlu0 %336
    %v338 = vsel %vm161, %v332, -inf
    %339 = vmax.xlane.f32.xlu0 %v338
    %v340 = vpop.xlane.xlu0 %339
    %v341 = vsub.f32 %v329, %v337
    %v342 = vsub.f32 %v332, %v340
    %v343 = vmul.f32 %v341, 1.442695
    %v344 = vpow.pop %v343
    %v345 = vmul.f32 %v342, 1.442695
    %v346 = vpow.pop %v345
    %v347 = vsel %vm161, %v344, 0.0
    %348 = vadd.xlane.f32.xlu0 %v347
    %v349 = vpop.xlane.xlu0 %348
    %v350 = vsel %vm161, %v346, 0.0
    %351 = vadd.xlane.f32.xlu0 %v350
    %v352 = vpop.xlane.xlu0 %351
    %v353 = vpack.c.bf16 %v346, %v344
    %354 = vrot.lane.b32.xlu0 %v150, 72
    %v355 = vpop.permute.xlu0 %354
    %v357 = vsel %vm161, %v353, 0
    %v360 = vsel %vm234, %v355, 0
    %362 = vmatprep.subr.bf16.mxu0 0
    %363 = vmatpush1.bf16.msra.mxu0 0
    %364 = vmatprep.subr.bf16.mxu0 0
    %365 = vmatpush1.bf16.msra.mxu0 0
    %366 = vmatprep.subr.bf16.mxu0 0
    %367 = vmatpush1.bf16.msra.mxu0 0
    %368 = vmatprep.subr.bf16.mxu0 0
    %369 = vmatpush1.bf16.msra.mxu0 0
    %370 = vmatprep.subr.bf16.mxu0 0
    %371 = vmatpush1.bf16.msra.mxu0 0
    %372 = vmatprep.subr.bf16.mxu0 0
    %373 = vmatpush1.bf16.msra.mxu0 0
    %374 = vmatprep.subr.bf16.mxu0 0
    %375 = vmatpush1.bf16.msra.mxu0 0
    %376 = vmatprep.subr.bf16.mxu0 0
    %377 = vmatpush1.bf16.msra.mxu0 %v360
    %378 = vmatprep.subr.bf16.mxu0 0
    %379 = vmatpush2.bf16.msra.mxu0 0
    %380 = vmatprep.subr.bf16.mxu0 0
    %381 = vmatpush2.bf16.msra.mxu0 0
    %382 = vmatprep.subr.bf16.mxu0 0
    %383 = vmatpush2.bf16.msra.mxu0 0
    %384 = vmatprep.subr.bf16.mxu0 0
    %385 = vmatpush2.bf16.msra.mxu0 0
    %386 = vmatprep.subr.bf16.mxu0 0
    %387 = vmatpush2.bf16.msra.mxu0 0
    %388 = vmatprep.subr.bf16.mxu0 0
    %389 = vmatpush2.bf16.msra.mxu0 0
    %390 = vmatprep.subr.bf16.mxu0 0
    %391 = vmatpush2.bf16.msra.mxu0 0
    %392 = vmatprep.subr.bf16.mxu0 0
    %393 = vmatpush2.bf16.msra.mxu0 0
    %394 = vmatprep.mubr.bf16.mxu0 0
    %395 = vmatmul.mubr.bf16.gmra.mxu0 %v357
    %v396 = vpop.f32.mrf.mxu0
    %v397 = vadd.f32 0.0, %v396
    %v398 = vpop.f32.mrf.mxu0
    %v399 = vpop.f32.mrf.mxu0
    %v400 = vadd.f32 0.0, %v399
    %v401 = vpop.f32.mrf.mxu0
    %402 = vdwg.mxu0
    %v403 = vrcp.pop %v349
    %v404 = vrcp.pop %v352
    %v405 = vmul.f32 %v397, %v403
    %v406 = vmul.f32 %v400, %v404
    %408 = vrot.lane.b32.xlu0 %v282, 8
    %v409 = vpop.permute.xlu0 %408
    %412 = vrot.lane.b32.xlu0 %v405, 16
    %v413 = vpop.permute.xlu0 %412
    %416 = vrot.lane.b32.xlu0 %v406, 24
    %v417 = vpop.permute.xlu0 %416
    %v419 = vsel %vm161, %v281, %v409
    %vm420 = vcmask 130048
    %v421 = vsel %vm420, %v419, %v413
    %vm422 = vcmask 195584
    %v423 = vsel %vm422, %v421, %v417
    %v424 = vpack.c.bf16 %v423, %v423
    %v425 = vld [vmem:[%s2] sm:$0xf]
    %v426 = vld [vmem:[%s2 + $0x4] sm:$0xf]
    %v427 = vld [vmem:[%s2 + $0x8] sm:$0xf]
    %v428 = vld [vmem:[%s2 + $0xc] sm:$0xf]
    %v433 = vunpack.c.l.b16 %v425
    %v434 = vunpack.c.l.b16 %v426
    %v435 = vunpack.c.l.b16 %v427
    %v436 = vunpack.c.l.b16 %v428
    %v437 = vpack.c.b16 %v434, %v433
    %v438 = vpack.c.b16 %v436, %v435
    %v442 = vsel %vm57, %v424, 0
    %444 = vmatprep.subr.bf16.mxu0 0
    %445 = vmatpush1.bf16.msra.mxu0 0
    %446 = vmatprep.subr.bf16.mxu0 0
    %447 = vmatpush1.bf16.msra.mxu0 0
    %448 = vmatprep.subr.bf16.mxu0 0
    %449 = vmatpush1.bf16.msra.mxu0 0
    %450 = vmatprep.subr.bf16.mxu0 0
    %451 = vmatpush1.bf16.msra.mxu0 0
    %452 = vmatprep.subr.bf16.mxu0 0
    %453 = vmatpush1.bf16.msra.mxu0 0
    %454 = vmatprep.subr.bf16.mxu0 0
    %455 = vmatpush1.bf16.msra.mxu0 0
    %456 = vmatprep.subr.bf16.mxu0 0
    %457 = vmatpush1.bf16.msra.mxu0 %v438
    %458 = vmatprep.subr.bf16.mxu0 0
    %459 = vmatpush1.bf16.msra.mxu0 %v437
    %460 = vmatprep.subr.bf16.mxu0 0
    %461 = vmatpush2.bf16.msra.mxu0 0
    %462 = vmatprep.subr.bf16.mxu0 0
    %463 = vmatpush2.bf16.msra.mxu0 0
    %464 = vmatprep.subr.bf16.mxu0 0
    %465 = vmatpush2.bf16.msra.mxu0 0
    %466 = vmatprep.subr.bf16.mxu0 0
    %467 = vmatpush2.bf16.msra.mxu0 0
    %468 = vmatprep.subr.bf16.mxu0 0
    %469 = vmatpush2.bf16.msra.mxu0 0
    %470 = vmatprep.subr.bf16.mxu0 0
    %471 = vmatpush2.bf16.msra.mxu0 0
    %472 = vmatprep.subr.bf16.mxu0 0
    %473 = vmatpush2.bf16.msra.mxu0 0
    %474 = vmatprep.subr.bf16.mxu0 0
    %475 = vmatpush2.bf16.msra.mxu0 0
    %476 = vmatprep.mubr.bf16.mxu0 0
    %477 = vmatmul.mubr.bf16.gmra.mxu0 %v442
    %v478 = vpop.f32.mrf.mxu0
    %v479 = vadd.f32 0.0, %v478
    %v480 = vpop.f32.mrf.mxu0
    %v481 = vpop.f32.mrf.mxu0
    %v482 = vpop.f32.mrf.mxu0
    %483 = vdwg.mxu0
    %v484 = vadd.f32 %v54, %v479
    %v485 = vld [vmem:[%s5 + $0x1] sm:$0x1]
    %v486 = vmul.f32 %v484, %v484
    %v487 = vsel %vm57, %v486, 0.0
    %488 = vadd.xlane.f32.xlu0 %v487
    %v489 = vpop.xlane.xlu0 %488
    %v490 = vmul.f32 %v489, %v61
    %v491 = vadd.f32 %v490, 1e-06
    %v492 = vrsqrt.pop %v491
    %v493 = vmul.f32 %v484, %v492
    %v494 = vlaneseq
    %v495 = vshrl.u32 %v494, 7
    %v496 = vsub.s32 0, %v495
    %v497 = vrot.slane %v485, %v496
    %v498 = vmul.f32 %v493, %v497
    %v499 = vpack.c.bf16 %v498, %v498
    %v500 = vld [vmem:[%s3] sm:$0xf]
    %v501 = vld [vmem:[%s3 + $0x4] sm:$0xf]
    %v502 = vld [vmem:[%s3 + $0x8] sm:$0xf]
    %v503 = vld [vmem:[%s3 + $0xc] sm:$0xf]
    %v508 = vunpack.c.l.b16 %v500
    %v509 = vunpack.c.l.b16 %v501
    %v510 = vunpack.c.l.b16 %v502
    %v511 = vunpack.c.l.b16 %v503
    %v512 = vpack.c.b16 %v509, %v508
    %v513 = vpack.c.b16 %v511, %v510
    %v517 = vsel %vm57, %v499, 0
    %519 = vmatprep.subr.bf16.mxu0 0
    %520 = vmatpush1.bf16.msra.mxu0 0
    %521 = vmatprep.subr.bf16.mxu0 0
    %522 = vmatpush1.bf16.msra.mxu0 0
    %523 = vmatprep.subr.bf16.mxu0 0
    %524 = vmatpush1.bf16.msra.mxu0 0
    %525 = vmatprep.subr.bf16.mxu0 0
    %526 = vmatpush1.bf16.msra.mxu0 0
    %527 = vmatprep.subr.bf16.mxu0 0
    %528 = vmatpush1.bf16.msra.mxu0 0
    %529 = vmatprep.subr.bf16.mxu0 0
    %530 = vmatpush1.bf16.msra.mxu0 0
    %531 = vmatprep.subr.bf16.mxu0 0
    %532 = vmatpush1.bf16.msra.mxu0 %v513
    %533 = vmatprep.subr.bf16.mxu0 0
    %534 = vmatpush1.bf16.msra.mxu0 %v512
    %535 = vmatprep.subr.bf16.mxu0 0
    %536 = vmatpush2.bf16.msra.mxu0 0
    %537 = vmatprep.subr.bf16.mxu0 0
    %538 = vmatpush2.bf16.msra.mxu0 0
    %539 = vmatprep.subr.bf16.mxu0 0
    %540 = vmatpush2.bf16.msra.mxu0 0
    %541 = vmatprep.subr.bf16.mxu0 0
    %542 = vmatpush2.bf16.msra.mxu0 0
    %543 = vmatprep.subr.bf16.mxu0 0
    %544 = vmatpush2.bf16.msra.mxu0 0
    %545 = vmatprep.subr.bf16.mxu0 0
    %546 = vmatpush2.bf16.msra.mxu0 0
    %547 = vmatprep.subr.bf16.mxu0 0
    %548 = vmatpush2.bf16.msra.mxu0 0
    %549 = vmatprep.subr.bf16.mxu0 0
    %550 = vmatpush2.bf16.msra.mxu0 0
    %551 = vmatprep.mubr.bf16.mxu0 0
    %552 = vmatmul.mubr.bf16.gmra.mxu0 %v517
    %v553 = vpop.f32.mrf.mxu0
    %v554 = vadd.f32 0.0, %v553
    %v555 = vpop.f32.mrf.mxu0
    %v556 = vpop.f32.mrf.mxu0
    %v557 = vpop.f32.mrf.mxu0
    %558 = vdwg.mxu0
    %v559 = vxor.u32 %v554, 2147483648
    %v560 = vmul.f32 %v559, 1.442695
    %v561 = vpow.pop %v560
    %v562 = vadd.f32 %v561, 1.0
    %v563 = vrcp.pop %v562
    %v564 = vmul.f32 1.0, %v563
    %v565 = vmul.f32 %v554, %v564
    %567 = vrot.lane.b32.xlu0 %v554, 64
    %v568 = vpop.permute.xlu0 %567
    %v570 = vmul.f32 %v565, %v568
    %v571 = vpack.c.bf16 %v570, %v570
    %v572 = vld [vmem:[%s4] sm:$0xf]
    %v573 = vld [vmem:[%s4 + $0x4] sm:$0xf]
    %v574 = vld [vmem:[%s4 + $0x8] sm:$0xf]
    %v575 = vld [vmem:[%s4 + $0xc] sm:$0xf]
    %v576 = vld [vmem:[%s4 + $0x10] sm:$0xf]
    %v577 = vld [vmem:[%s4 + $0x14] sm:$0xf]
    %v578 = vld [vmem:[%s4 + $0x18] sm:$0xf]
    %v579 = vld [vmem:[%s4 + $0x1c] sm:$0xf]
    %v588 = vunpack.c.l.b16 %v572
    %v589 = vunpack.c.l.b16 %v573
    %v590 = vunpack.c.l.b16 %v574
    %v591 = vunpack.c.l.b16 %v575
    %v592 = vunpack.c.l.b16 %v576
    %v593 = vunpack.c.l.b16 %v577
    %v594 = vunpack.c.l.b16 %v578
    %v595 = vunpack.c.l.b16 %v579
    %v596 = vpack.c.b16 %v589, %v588
    %v597 = vpack.c.b16 %v591, %v590
    %v598 = vpack.c.b16 %v593, %v592
    %v599 = vpack.c.b16 %v595, %v594
    %vm604 = vcmask 523264
    %v606 = vsel %vm604, %v571, 0
    %608 = vmatprep.subr.bf16.mxu0 0
    %609 = vmatpush1.bf16.msra.mxu0 0
    %610 = vmatprep.subr.bf16.mxu0 0
    %611 = vmatpush1.bf16.msra.mxu0 0
    %612 = vmatprep.subr.bf16.mxu0 0
    %613 = vmatpush1.bf16.msra.mxu0 0
    %614 = vmatprep.subr.bf16.mxu0 0
    %615 = vmatpush1.bf16.msra.mxu0 0
    %616 = vmatprep.subr.bf16.mxu0 0
    %617 = vmatpush1.bf16.msra.mxu0 %v599
    %618 = vmatprep.subr.bf16.mxu0 0
    %619 = vmatpush1.bf16.msra.mxu0 %v598
    %620 = vmatprep.subr.bf16.mxu0 0
    %621 = vmatpush1.bf16.msra.mxu0 %v597
    %622 = vmatprep.subr.bf16.mxu0 0
    %623 = vmatpush1.bf16.msra.mxu0 %v596
    %624 = vmatprep.subr.bf16.mxu0 0
    %625 = vmatpush2.bf16.msra.mxu0 0
    %626 = vmatprep.subr.bf16.mxu0 0
    %627 = vmatpush2.bf16.msra.mxu0 0
    %628 = vmatprep.subr.bf16.mxu0 0
    %629 = vmatpush2.bf16.msra.mxu0 0
    %630 = vmatprep.subr.bf16.mxu0 0
    %631 = vmatpush2.bf16.msra.mxu0 0
    %632 = vmatprep.subr.bf16.mxu0 0
    %633 = vmatpush2.bf16.msra.mxu0 0
    %634 = vmatprep.subr.bf16.mxu0 0
    %635 = vmatpush2.bf16.msra.mxu0 0
    %636 = vmatprep.subr.bf16.mxu0 0
    %637 = vmatpush2.bf16.msra.mxu0 0
    %638 = vmatprep.subr.bf16.mxu0 0
    %639 = vmatpush2.bf16.msra.mxu0 0
    %640 = vmatprep.mubr.bf16.mxu0 0
    %641 = vmatmul.mubr.bf16.gmra.mxu0 %v606
    %v642 = vpop.f32.mrf.mxu0
    %v643 = vadd.f32 0.0, %v642
    %v644 = vpop.f32.mrf.mxu0
    %v645 = vpop.f32.mrf.mxu0
    %v646 = vpop.f32.mrf.mxu0
    %647 = vdwg.mxu0
    %v648 = vadd.f32 %v484, %v643
    %649 = vst.msk [vmem:[#allocation7] sm:$0xff] %vm57, %v648
    // Predicated region
    $region38: #{transformer_block.1} parent=1 // pred_check
      _
    $region39: #{transformer_block.1} parent=1 // pred_check_branch
      %651 = sbr.rel (0) target = $region41
    $region40: #{transformer_block.1} parent=1 // pred_region
      %s653 = ssub.s32 128, 128
      %654 = vsyncadd [#allocation4], %s653
      %s656 = sshll.u32 [#allocation7], 4
      %s657 = int_to_ptr.vmem [resolvable:$true] %s656
      %659 = dma.vmem_to_hbm [thread:$0]  %s657, 128, %s7, [#allocation4]
    $region41: #{transformer_block.1} parent=1 // pred_fallthru
      _
    // Predicated region
    $region42: #{transformer_block.1} parent=1 // pred_check
      _
    $region43: #{transformer_block.1} parent=1 // pred_check_branch
      %661 = sbr.rel (0) target = $region45
    $region44: #{transformer_block.1} parent=1 // pred_region
      %662 = dma.done [#allocation4], 128
    $region45: #{transformer_block.1} parent=1 // pred_fallthru
      _
    %663 = vsyncpa [#allocation3], 1
    %664 = vsyncpa [#allocation6], 1
    %665 = vsyncpa [#allocation4], 1

</llo_original>
